<compile_context>
chip_gen: v7x
topology: tpu7x:2x2x1
jax: 0.10.0
libtpu: 0.0.40
codegen_flags: <defaults>
</compile_context>

<pallas_src>
import math
from functools import partial

import jax
import jax.numpy as jnp
from jax import lax
from jax.experimental import pallas as pl
from jax.experimental.pallas import tpu as pltpu


def _round_up(x, m):
    return ((x + m - 1) // m) * m


def _query_vmem_bytes():
    try:
        return int(pltpu.get_tpu_info().vmem_capacity_bytes)
    except Exception:
        return 64 << 20  # conservative fallback: v7x per-TC physical VMEM


_VMEM_BYTES = _query_vmem_bytes()
# Raise the scoped VMEM limit above the 16/32 MiB defaults (v5e/v6e) while
# keeping headroom below physical capacity (64 MiB on v7x).
_VMEM_LIMIT_BYTES = int(min(_VMEM_BYTES, 128 << 20) * 3 // 4)

_NEG_BIG = -1e30  # masked-logit fill; exp() underflows cleanly to 0


def _select_tiles(n, d_pad):
    """Pick (tq, tkv, n_pad): VMEM-capacity aware, MXU-aligned tiles."""
    if n <= 256:
        t = _round_up(max(n, 8), 8)          # one tile, sublane aligned
        return t, t, t

    budget = _VMEM_BYTES // 3                # working-set share (headroom)
    bf2, f4 = 2, 4

    def footprint(tq, tkv):
        return (2 * tq * d_pad * bf2           # h q-row stream (double-buffered)
                + 2 * tkv * d_pad * bf2        # h kv-row stream (double-buffered)
                + 2 * 2 * d_pad * d_pad * bf2  # Wq + Wk resident (double-buffered)
                + tq * d_pad * bf2             # q scratch (bf16)
                + tq * d_pad * f4              # f32 accumulator
                + 3 * tq * tkv * f4            # logits / exp temporaries
                + tkv * d_pad * (f4 + bf2)     # recomputed k tile
                + 2 * 8 * d_pad * f4)          # (8, D) partial output

    t = 128                                   # v5e MXU only needs 128-alignment
    for cand in (1024, 512, 256):             # 256-aligned fills v6e/v7x MXU
        if cand <= _round_up(n, 128) and footprint(cand, cand) <= budget:
            t = cand
            break
    tq = tkv = t
    # Give the "parallel" q axis >= 2 tiles so v7x's two TensorCores both work.
    if _round_up(n, tkv) // tq < 2 and tq >= 256:
        tq //= 2
    n_pad = _round_up(n, max(tq, tkv))        # tq divides tkv here
    return tq, tkv, n_pad


# TODO(synk): stream Wq/Wk over a feature-tile grid axis for very large D
# (currently they are kept fully resident in VMEM).
def _fused_flash_attn_mean_kernel(
        hq_ref, hkv_ref, wq_ref, wk_ref, o_ref,
        q_sc, m_sc, l_sc, acc_sc,
        *, inv_sqrt_d, inv_n, n_real, tq, tkv):
    qi = pl.program_id(0)
    ki = pl.program_id(1)

    @pl.when(ki == 0)
    def _init():
        # Project this q-row tile once (first kv step); fold in 1/sqrt(D).
        q = jnp.dot(hq_ref[...], wq_ref[...],
                    preferred_element_type=jnp.float32)
        q_sc[...] = (q * inv_sqrt_d).astype(q_sc.dtype)
        m_sc[...] = jnp.full(m_sc.shape, -jnp.inf, dtype=m_sc.dtype)
        l_sc[...] = jnp.zeros(l_sc.shape, dtype=l_sc.dtype)
        acc_sc[...] = jnp.zeros(acc_sc.shape, dtype=acc_sc.dtype)

    # Recompute k from the already-resident kv tile of h (removes the
    # separate k HBM stream: ~D MXU flops per byte saved).
    k = jnp.dot(hkv_ref[...], wk_ref[...],
                preferred_element_type=jnp.float32).astype(hkv_ref.dtype)

    # Logits in NT form: contract the feature axis directly on the MXU.
    s = lax.dot_general(
        q_sc[...], k,
        dimension_numbers=(((1,), (1,)), ((), ())),
        preferred_element_type=jnp.float32)                    # (tq, tkv) f32

    # Mask padded key columns (N padded up to a tile multiple).
    col = ki * tkv + lax.broadcasted_iota(jnp.int32, s.shape, 1)
    s = jnp.where(col < n_real, s, _NEG_BIG)

    # Online softmax, f32 statistics.
    m_prev = m_sc[...]
    m_new = jnp.maximum(m_prev, jnp.max(s, axis=1, keepdims=True))
    alpha = jnp.exp(m_prev - m_new)
    p = jnp.exp(s - m_new)
    l_sc[...] = alpha * l_sc[...] + jnp.sum(p, axis=1, keepdims=True)
    acc_sc[...] = alpha * acc_sc[...] + jnp.dot(
        p.astype(hkv_ref.dtype), hkv_ref[...],
        preferred_element_type=jnp.float32)
    m_sc[...] = m_new

    @pl.when(ki == pl.num_programs(1) - 1)
    def _finalize():
        # Per-q-tile partial of the answer: (1/N) * sum_i acc_i / l_i over the
        # *valid* rows of this tile (padded q rows get zero weight).
        row = qi * tq + lax.broadcasted_iota(jnp.int32, m_sc.shape, 0)
        w = jnp.where(row < n_real,
                      pl.reciprocal(l_sc[...], approx=False) * inv_n,
                      0.0)                                       # (tq, 1)
        part = jnp.sum(acc_sc[...] * w, axis=0, keepdims=True)   # (1, D)
        # Sublane/lane-dense writeback: fill the whole (8, D) block.
        o_ref[...] = jnp.broadcast_to(part[None], o_ref.shape)


@jax.jit
def self_attention_layer2(h, wq, wk):
    """Pallas TPU implementation of SelfAttentionLayer2.forward.

    h: (N, D)   wq, wk: (D, D)   returns: (D,) in h.dtype.
    """
    n, dim = h.shape
    assert wq.shape == (dim, dim) and wk.shape == (dim, dim)
    inv_sqrt_d = 1.0 / math.sqrt(dim)   # uses the REAL dim
    inv_n = 1.0 / n                     # uses the REAL N

    # Lane-dense feature axis; zero padding keeps the math exact.
    d_pad = _round_up(dim, 128)
    tq, tkv, n_pad = _select_tiles(n, d_pad)
    num_q, num_kv = n_pad // tq, n_pad // tkv

    # bf16 MXU operands (f32 accumulation inside the kernel).
    cdt = jnp.bfloat16
    h_p = jnp.pad(h.astype(cdt), ((0, n_pad - n), (0, d_pad - dim)))
    wq_p = jnp.pad(wq.astype(cdt), ((0, d_pad - dim), (0, d_pad - dim)))
    wk_p = jnp.pad(wk.astype(cdt), ((0, d_pad - dim), (0, d_pad - dim)))

    kernel = partial(_fused_flash_attn_mean_kernel,
                     inv_sqrt_d=inv_sqrt_d, inv_n=inv_n,
                     n_real=n, tq=tq, tkv=tkv)

    partials = pl.pallas_call(
        kernel,
        out_shape=jax.ShapeDtypeStruct((num_q, 8, d_pad), jnp.float32),
        grid=(num_q, num_kv),
        in_specs=[
            pl.BlockSpec((tq, d_pad), lambda qi, ki: (qi, 0)),    # h, q rows
            pl.BlockSpec((tkv, d_pad), lambda qi, ki: (ki, 0)),   # h, kv rows
            pl.BlockSpec((d_pad, d_pad), lambda qi, ki: (0, 0)),  # Wq (resident)
            pl.BlockSpec((d_pad, d_pad), lambda qi, ki: (0, 0)),  # Wk (resident)
        ],
        out_specs=pl.BlockSpec((1, 8, d_pad), lambda qi, ki: (qi, 0, 0)),
        scratch_shapes=[
            pltpu.VMEM((tq, d_pad), cdt),          # projected + scaled q tile
            pltpu.VMEM((tq, 1), jnp.float32),      # running max
            pltpu.VMEM((tq, 1), jnp.float32),      # running denominator
            pltpu.VMEM((tq, d_pad), jnp.float32),  # running numerator
        ],
        compiler_params=pltpu.CompilerParams(
            dimension_semantics=("parallel", "arbitrary"),
            vmem_limit_bytes=_VMEM_LIMIT_BYTES),
    )(h_p, h_p, wq_p, wk_p)

    # Rows of each (8, D) block are identical copies; take row 0 and sum the
    # (megacore-parallel) per-q-tile partials.
    out = jnp.sum(partials[:, 0, :], axis=0)
    return out[:dim].astype(h.dtype)


# ---------------------------------------------------------------------------
# Reference + demo
# ---------------------------------------------------------------------------
def _xavier_uniform(key, dim, gain):
    # nn.init.xavier_uniform_ on (dim, dim): bound = gain * sqrt(6 / (2*dim))
    bound = gain * math.sqrt(6.0 / (2.0 * dim))
    return jax.random.uniform(key, (dim, dim), jnp.float32, -bound, bound)


def reference(h, wq, wk):
    dim = h.shape[1]
    q = h @ wq
    k = h @ wk
    e = (q @ k.T) / math.sqrt(dim)
    a = jax.nn.softmax(e, axis=1)
    a = a.mean(axis=0)
    return a @ h


if __name__ == "__main__":
    N, DIM = 8, 32  # small shapes consistent with the module (h: (N, dim))
    key = jax.random.PRNGKey(0)
    k_h, k_wq, k_wk = jax.random.split(key, 3)

    h = jax.random.normal(k_h, (N, DIM), jnp.float32)
    wq = _xavier_uniform(k_wq, DIM, gain=1.414)
    wk = _xavier_uniform(k_wk, DIM, gain=1.414)

    out = jax.block_until_ready(self_attention_layer2(h, wq, wk))
    assert out.shape == (DIM,) and out.dtype == h.dtype

    ref = reference(h, wq, wk)
    err = float(jnp.max(jnp.abs(out - ref)))
    # Tolerance loosened vs the f32 reference because MXU operands are bf16
    # (per the performance review); softmax stats / accumulation stay f32.
    assert err < 5e-2, err

    print("KERNEL_OK")
</pallas_src>

<mosaic_0001>
module attributes {stable_mosaic.version = 11 : i64} {
  func.func @_fused_flash_attn_mean_kernel(%arg0: i32, %arg1: i32, %arg2: memref<8x128xbf16, #tpu.memory_space<vmem>>, %arg3: memref<8x128xbf16, #tpu.memory_space<vmem>>, %arg4: memref<128x128xbf16, #tpu.memory_space<vmem>>, %arg5: memref<128x128xbf16, #tpu.memory_space<vmem>>, %arg6: memref<1x8x128xf32, #tpu.memory_space<vmem>>, %arg7: memref<8x128xbf16, #tpu.memory_space<vmem>>, %arg8: memref<8x1xf32, #tpu.memory_space<vmem>>, %arg9: memref<8x1xf32, #tpu.memory_space<vmem>>, %arg10: memref<8x128xf32, #tpu.memory_space<vmem>>) attributes {dimension_semantics = [#tpu.dimension_semantics<parallel>, #tpu.dimension_semantics<arbitrary>], iteration_bounds = array<i64: 1, 1>, scalar_prefetch = 0 : i64, scratch_operands = 4 : i64, tpu.core_type = #tpu.core_type<tc>, window_params = [{transform_indices = @transform_0, window_bounds = array<i64: 8, 128>}, {transform_indices = @transform_1, window_bounds = array<i64: 8, 128>}, {pipeline_mode = #tpu.pipeline_mode<synchronous>, transform_indices = @transform_2, window_bounds = array<i64: 128, 128>}, {pipeline_mode = #tpu.pipeline_mode<synchronous>, transform_indices = @transform_3, window_bounds = array<i64: 128, 128>}, {transform_indices = @transform_4, window_bounds = array<i64: 1, 8, 128>}]} {
    %c0_i32 = arith.constant 0 : i32
    %0 = arith.cmpi eq, %arg1, %c0_i32 : i32
    %1 = arith.extui %0 : i1 to i32
    %c0_i32_0 = arith.constant 0 : i32
    %2 = arith.cmpi ne, %1, %c0_i32_0 : i32
    scf.if %2 {
      %c0_28 = arith.constant 0 : index
      %c0_29 = arith.constant 0 : index
      %44 = vector.load %arg2[%c0_28, %c0_29] : memref<8x128xbf16, #tpu.memory_space<vmem>>, vector<8x128xbf16>
      %c0_30 = arith.constant 0 : index
      %c0_31 = arith.constant 0 : index
      %45 = vector.load %arg4[%c0_30, %c0_31] : memref<128x128xbf16, #tpu.memory_space<vmem>>, vector<128x128xbf16>
      %cst_32 = arith.constant dense<0.000000e+00> : vector<8x128xf32>
      %46 = tpu.matmul %44, %45, %cst_32 {dimension_numbers = #tpu.dot_dimension_numbers<[1], [0], [0], [1], [0, 0, 1, 1], [], []>} : vector<8x128xbf16>, vector<128x128xbf16>, vector<8x128xf32> -> vector<8x128xf32>
      %cst_33 = arith.constant 0.176776692 : f32
      %47 = vector.broadcast %cst_33 : f32 to vector<8x128xf32>
      %48 = arith.mulf %46, %47 : vector<8x128xf32>
      %49 = arith.truncf %48 : vector<8x128xf32> to vector<8x128xbf16>
      %c0_34 = arith.constant 0 : index
      %c0_35 = arith.constant 0 : index
      %50 = vector.load %arg7[%c0_34, %c0_35] : memref<8x128xbf16, #tpu.memory_space<vmem>>, vector<8x128xbf16>
      tpu.vector_store %arg7[%c0_34, %c0_35], %49 {strides = array<i32>} : memref<8x128xbf16, #tpu.memory_space<vmem>>, vector<8x128xbf16>,
      %cst_36 = arith.constant 0xFF800000 : f32
      %51 = vector.broadcast %cst_36 : f32 to vector<8x1xf32>
      %c0_37 = arith.constant 0 : index
      %c0_38 = arith.constant 0 : index
      %52 = vector.load %arg8[%c0_37, %c0_38] : memref<8x1xf32, #tpu.memory_space<vmem>>, vector<8x1xf32>
      tpu.vector_store %arg8[%c0_37, %c0_38], %51 {strides = array<i32>} : memref<8x1xf32, #tpu.memory_space<vmem>>, vector<8x1xf32>,
      %cst_39 = arith.constant 0.000000e+00 : f32
      %53 = vector.broadcast %cst_39 : f32 to vector<8x1xf32>
      %c0_40 = arith.constant 0 : index
      %c0_41 = arith.constant 0 : index
      %54 = vector.load %arg9[%c0_40, %c0_41] : memref<8x1xf32, #tpu.memory_space<vmem>>, vector<8x1xf32>
      tpu.vector_store %arg9[%c0_40, %c0_41], %53 {strides = array<i32>} : memref<8x1xf32, #tpu.memory_space<vmem>>, vector<8x1xf32>,
      %cst_42 = arith.constant 0.000000e+00 : f32
      %55 = vector.broadcast %cst_42 : f32 to vector<8x128xf32>
      %c0_43 = arith.constant 0 : index
      %c0_44 = arith.constant 0 : index
      %56 = vector.load %arg10[%c0_43, %c0_44] : memref<8x128xf32, #tpu.memory_space<vmem>>, vector<8x128xf32>
      tpu.vector_store %arg10[%c0_43, %c0_44], %55 {strides = array<i32>} : memref<8x128xf32, #tpu.memory_space<vmem>>, vector<8x128xf32>,
    } else {
    }
    %c0 = arith.constant 0 : index
    %c0_1 = arith.constant 0 : index
    %3 = vector.load %arg3[%c0, %c0_1] : memref<8x128xbf16, #tpu.memory_space<vmem>>, vector<8x128xbf16>
    %c0_2 = arith.constant 0 : index
    %c0_3 = arith.constant 0 : index
    %4 = vector.load %arg5[%c0_2, %c0_3] : memref<128x128xbf16, #tpu.memory_space<vmem>>, vector<128x128xbf16>
    %cst = arith.constant dense<0.000000e+00> : vector<8x128xf32>
    %5 = tpu.matmul %3, %4, %cst {dimension_numbers = #tpu.dot_dimension_numbers<[1], [0], [0], [1], [0, 0, 1, 1], [], []>} : vector<8x128xbf16>, vector<128x128xbf16>, vector<8x128xf32> -> vector<8x128xf32>
    %6 = arith.truncf %5 : vector<8x128xf32> to vector<8x128xbf16>
    %c0_4 = arith.constant 0 : index
    %c0_5 = arith.constant 0 : index
    %7 = vector.load %arg7[%c0_4, %c0_5] : memref<8x128xbf16, #tpu.memory_space<vmem>>, vector<8x128xbf16>
    %cst_6 = arith.constant dense<0.000000e+00> : vector<8x8xf32>
    %8 = tpu.matmul %7, %6, %cst_6 {dimension_numbers = #tpu.dot_dimension_numbers<[1], [1], [0], [0], [0, 0, 1, 0], [], []>} : vector<8x128xbf16>, vector<8x128xbf16>, vector<8x8xf32> -> vector<8x8xf32>
    %c8_i32 = arith.constant 8 : i32
    %9 = arith.muli %arg1, %c8_i32 : i32
    %10 = tpu.iota {dimensions = array<i32: 1>} : vector<8x8xi32>
    %11 = vector.broadcast %9 : i32 to vector<8x8xi32>
    %12 = arith.addi %11, %10 : vector<8x8xi32>
    %c8_i32_7 = arith.constant 8 : i32
    %13 = vector.broadcast %c8_i32_7 : i32 to vector<8x8xi32>
    %14 = arith.cmpi slt, %12, %13 : vector<8x8xi32>
    %cst_8 = arith.constant -1.000000e+30 : f32
    %15 = vector.broadcast %cst_8 : f32 to vector<8x8xf32>
    %16 = arith.select %14, %8, %15 : vector<8x8xi1>, vector<8x8xf32>
    %c0_9 = arith.constant 0 : index
    %c0_10 = arith.constant 0 : index
    %17 = vector.load %arg8[%c0_9, %c0_10] : memref<8x1xf32, #tpu.memory_space<vmem>>, vector<8x1xf32>
    %cst_11 = arith.constant dense<0xFF800000> : vector<8xf32>
    %18 = vector.multi_reduction <maximumf>, %16, %cst_11 [1] : vector<8x8xf32> to vector<8xf32>
    %19 = vector.shape_cast %18 : vector<8xf32> to vector<8x1xf32>
    %20 = arith.maximumf %17, %19 : vector<8x1xf32>
    %21 = arith.subf %17, %20 : vector<8x1xf32>
    %22 = math.exp %21 : vector<8x1xf32>
    %23 = vector.broadcast %20 : vector<8x1xf32> to vector<8x8xf32>
    %24 = arith.subf %16, %23 : vector<8x8xf32>
    %25 = math.exp %24 : vector<8x8xf32>
    %c0_12 = arith.constant 0 : index
    %c0_13 = arith.constant 0 : index
    %26 = vector.load %arg9[%c0_12, %c0_13] : memref<8x1xf32, #tpu.memory_space<vmem>>, vector<8x1xf32>
    %27 = arith.mulf %22, %26 : vector<8x1xf32>
    %cst_14 = arith.constant dense<0.000000e+00> : vector<8xf32>
    %28 = vector.multi_reduction <add>, %25, %cst_14 [1] : vector<8x8xf32> to vector<8xf32>
    %29 = vector.shape_cast %28 : vector<8xf32> to vector<8x1xf32>
    %30 = arith.addf %27, %29 : vector<8x1xf32>
    %c0_15 = arith.constant 0 : index
    %c0_16 = arith.constant 0 : index
    %31 = vector.load %arg9[%c0_15, %c0_16] : memref<8x1xf32, #tpu.memory_space<vmem>>, vector<8x1xf32>
    tpu.vector_store %arg9[%c0_15, %c0_16], %30 {strides = array<i32>} : memref<8x1xf32, #tpu.memory_space<vmem>>, vector<8x1xf32>,
    %c0_17 = arith.constant 0 : index
    %c0_18 = arith.constant 0 : index
    %32 = vector.load %arg10[%c0_17, %c0_18] : memref<8x128xf32, #tpu.memory_space<vmem>>, vector<8x128xf32>
    %33 = vector.broadcast %22 : vector<8x1xf32> to vector<8x128xf32>
    %34 = arith.mulf %33, %32 : vector<8x128xf32>
    %35 = arith.truncf %25 : vector<8x8xf32> to vector<8x8xbf16>
    %c0_19 = arith.constant 0 : index
    %c0_20 = arith.constant 0 : index
    %36 = vector.load %arg3[%c0_19, %c0_20] : memref<8x128xbf16, #tpu.memory_space<vmem>>, vector<8x128xbf16>
    %cst_21 = arith.constant dense<0.000000e+00> : vector<8x128xf32>
    %37 = tpu.matmul %35, %36, %cst_21 {dimension_numbers = #tpu.dot_dimension_numbers<[1], [0], [0], [1], [0, 0, 1, 1], [], []>} : vector<8x8xbf16>, vector<8x128xbf16>, vector<8x128xf32> -> vector<8x128xf32>
    %38 = arith.addf %34, %37 : vector<8x128xf32>
    %c0_22 = arith.constant 0 : index
    %c0_23 = arith.constant 0 : index
    %39 = vector.load %arg10[%c0_22, %c0_23] : memref<8x128xf32, #tpu.memory_space<vmem>>, vector<8x128xf32>
    tpu.vector_store %arg10[%c0_22, %c0_23], %38 {strides = array<i32>} : memref<8x128xf32, #tpu.memory_space<vmem>>, vector<8x128xf32>,
    %c0_24 = arith.constant 0 : index
    %c0_25 = arith.constant 0 : index
    %40 = vector.load %arg8[%c0_24, %c0_25] : memref<8x1xf32, #tpu.memory_space<vmem>>, vector<8x1xf32>
    tpu.vector_store %arg8[%c0_24, %c0_25], %20 {strides = array<i32>} : memref<8x1xf32, #tpu.memory_space<vmem>>, vector<8x1xf32>,
    %c0_i32_26 = arith.constant 0 : i32
    %41 = arith.cmpi eq, %arg1, %c0_i32_26 : i32
    %42 = arith.extui %41 : i1 to i32
    %c0_i32_27 = arith.constant 0 : i32
    %43 = arith.cmpi ne, %42, %c0_i32_27 : i32
    scf.if %43 {
      %c8_i32_28 = arith.constant 8 : i32
      %44 = arith.muli %arg0, %c8_i32_28 : i32
      %45 = tpu.iota {dimensions = array<i32: 0>} : vector<8x1xi32>
      %46 = vector.broadcast %44 : i32 to vector<8x1xi32>
      %47 = arith.addi %46, %45 : vector<8x1xi32>
      %c8_i32_29 = arith.constant 8 : i32
      %48 = vector.broadcast %c8_i32_29 : i32 to vector<8x1xi32>
      %49 = arith.cmpi slt, %47, %48 : vector<8x1xi32>
      %c0_30 = arith.constant 0 : index
      %c0_31 = arith.constant 0 : index
      %50 = vector.load %arg9[%c0_30, %c0_31] : memref<8x1xf32, #tpu.memory_space<vmem>>, vector<8x1xf32>
      %51 = tpu.reciprocal %50 : vector<8x1xf32> -> vector<8x1xf32>
      %cst_32 = arith.constant 1.250000e-01 : f32
      %52 = vector.broadcast %cst_32 : f32 to vector<8x1xf32>
      %53 = arith.mulf %51, %52 : vector<8x1xf32>
      %cst_33 = arith.constant 0.000000e+00 : f32
      %54 = vector.broadcast %cst_33 : f32 to vector<8x1xf32>
      %55 = arith.select %49, %53, %54 : vector<8x1xi1>, vector<8x1xf32>
      %c0_34 = arith.constant 0 : index
      %c0_35 = arith.constant 0 : index
      %56 = vector.load %arg10[%c0_34, %c0_35] : memref<8x128xf32, #tpu.memory_space<vmem>>, vector<8x128xf32>
      %57 = vector.broadcast %55 : vector<8x1xf32> to vector<8x128xf32>
      %58 = arith.mulf %56, %57 : vector<8x128xf32>
      %cst_36 = arith.constant dense<0.000000e+00> : vector<128xf32>
      %59 = vector.multi_reduction <add>, %58, %cst_36 [0] : vector<8x128xf32> to vector<128xf32>
      %60 = vector.shape_cast %59 : vector<128xf32> to vector<1x128xf32>
      %61 = vector.shape_cast %60 : vector<1x128xf32> to vector<1x1x128xf32>
      %62 = vector.shape_cast %61 : vector<1x1x128xf32> to vector<1x1x128xf32>
      %63 = vector.broadcast %62 : vector<1x1x128xf32> to vector<1x8x128xf32>
      %c0_37 = arith.constant 0 : index
      %c0_38 = arith.constant 0 : index
      %c0_39 = arith.constant 0 : index
      %64 = vector.load %arg6[%c0_37, %c0_38, %c0_39] : memref<1x8x128xf32, #tpu.memory_space<vmem>>, vector<1x8x128xf32>
      tpu.vector_store %arg6[%c0_37, %c0_38, %c0_39], %63 {strides = array<i32>} : memref<1x8x128xf32, #tpu.memory_space<vmem>>, vector<1x8x128xf32>,
    } else {
    }
    return
  }
  func.func @transform_0(%arg0: i32, %arg1: i32) -> (i32, i32) {
    %c0_i32 = arith.constant 0 : i32
    %c0_i32_0 = arith.constant 0 : i32
    return %arg0, %c0_i32 : i32, i32
  }
  func.func @transform_1(%arg0: i32, %arg1: i32) -> (i32, i32) {
    %c0_i32 = arith.constant 0 : i32
    %c0_i32_0 = arith.constant 0 : i32
    return %arg1, %c0_i32 : i32, i32
  }
  func.func @transform_2(%arg0: i32, %arg1: i32) -> (i32, i32) {
    %c0_i32 = arith.constant 0 : i32
    %c0_i32_0 = arith.constant 0 : i32
    %c0_i32_1 = arith.constant 0 : i32
    return %c0_i32, %c0_i32_0 : i32, i32
  }
  func.func @transform_3(%arg0: i32, %arg1: i32) -> (i32, i32) {
    %c0_i32 = arith.constant 0 : i32
    %c0_i32_0 = arith.constant 0 : i32
    %c0_i32_1 = arith.constant 0 : i32
    return %c0_i32, %c0_i32_0 : i32, i32
  }
  func.func @transform_4(%arg0: i32, %arg1: i32) -> (i32, i32, i32) {
    %c0_i32 = arith.constant 0 : i32
    %c0_i32_0 = arith.constant 0 : i32
    %c0_i32_1 = arith.constant 0 : i32
    return %arg0, %c0_i32, %c0_i32_0 : i32, i32, i32
  }
}

</mosaic_0001>

<llo_original>
// kernel: self_attention_layer2.1
$region0: #{self_attention_layer2.1}
  #allocation0 [shape = 'u32[]', space=smem, size = 0x4, offset = 0x4, fixed_abs, tag = 'smem constant byte address 0x4 - core index']
  #allocation1 [shape = 'u32[144,128]{1,0:T(1,128)}', space=vmem, size = 0x12000, scoped, tag = 'internal scratch']
  #allocation2 [shape = 'bf16[8,128]{1,0:T(8,128)(2,1)}', space=vmem, size = 0x800, scoped, tag = 'scratch operand']
  #allocation3 [shape = 'f32[8,1]{1,0:T(8,128)}', space=vmem, size = 0x1000, scoped, tag = 'scratch operand']
  #allocation4 [shape = 'f32[8,1]{1,0:T(8,128)}', space=vmem, size = 0x1000, scoped, tag = 'scratch operand']
  #allocation5 [shape = 'f32[8,128]{1,0:T(8,128)}', space=vmem, size = 0x1000, scoped, tag = 'scratch operand']
  %s0 = inlined_call_operand.vmem [shape: bf16[8,128], index: 0, kind: input, shape index: {}, may-alias: {0,1}]
  %s1 = inlined_call_operand.vmem [shape: bf16[8,128], index: 1, kind: input, shape index: {}, may-alias: {0,1}]
  %s2 = inlined_call_operand.vmem [shape: bf16[128,128], index: 2, kind: input, shape index: {}]
  %s3 = inlined_call_operand.vmem [shape: bf16[128,128], index: 3, kind: input, shape index: {}]
  %s4 = inlined_call_operand.vmem [shape: f32[1,8,128], index: 4, kind: output, shape index: {}]
  %s5 = sld [smem:[#allocation0]]
  $region34: #{self_attention_layer2.1} parent=0
    _
  %s7 = ssub.s32 1, %s5
  %s8 = scalar_select 0, %s7, %s5
  // Predicated region
  $region2: #{self_attention_layer2.1} parent=0 // pred_check
    _
  $region3: #{self_attention_layer2.1} parent=0 // pred_check_branch
    %10 = sbr.rel (0) target = $region5
  $region4: #{self_attention_layer2.1} parent=0 // pred_region
    _
  $region5: #{self_attention_layer2.1} parent=0 // pred_fallthru
    _
  // Predicated region
  $region6: #{self_attention_layer2.1} parent=0 // pred_check
    _
  $region7: #{self_attention_layer2.1} parent=0 // pred_check_branch
    %12 = sbr.rel (0) target = $region9
  $region8: #{self_attention_layer2.1} parent=0 // pred_region
    _
  $region9: #{self_attention_layer2.1} parent=0 // pred_fallthru
    _
  // Predicated region
  $region10: #{self_attention_layer2.1} parent=0 // pred_check
    _
  $region11: #{self_attention_layer2.1} parent=0 // pred_check_branch
    %14 = sbr.rel (0) target = $region13
  $region12: #{self_attention_layer2.1} parent=0 // pred_region
    _
  $region13: #{self_attention_layer2.1} parent=0 // pred_fallthru
    _
  // Predicated region
  $region14: #{self_attention_layer2.1} parent=0 // pred_check
    _
  $region15: #{self_attention_layer2.1} parent=0 // pred_check_branch
    %16 = sbr.rel (0) target = $region17
  $region16: #{self_attention_layer2.1} parent=0 // pred_region
    _
  $region17: #{self_attention_layer2.1} parent=0 // pred_fallthru
    _
  %p18 = scmp.eq.s32.totalorder 0, 0
  // Predicated region
  $region18: #{self_attention_layer2.1} parent=0 // pred_check
    %p19 = pneg %p18
  $region19: #{self_attention_layer2.1} parent=0 // pred_check_branch
    %21 = sbr.rel (%p19) target = $region21
  $region20: #{self_attention_layer2.1} parent=0 // pred_region
    %v22 = vld [vmem:[%s0] sm:$0xf]
    %v23 = vld [vmem:[%s2] sm:$0xf]
    %v24 = vld [vmem:[%s2 + $0x4] sm:$0xf]
    %v25 = vld [vmem:[%s2 + $0x8] sm:$0xf]
    %v26 = vld [vmem:[%s2 + $0xc] sm:$0xf]
    %v27 = vld [vmem:[%s2 + $0x10] sm:$0xf]
    %v28 = vld [vmem:[%s2 + $0x14] sm:$0xf]
    %v29 = vld [vmem:[%s2 + $0x18] sm:$0xf]
    %v30 = vld [vmem:[%s2 + $0x1c] sm:$0xf]
    %v31 = vld [vmem:[%s2 + $0x20] sm:$0xf]
    %v32 = vld [vmem:[%s2 + $0x24] sm:$0xf]
    %v33 = vld [vmem:[%s2 + $0x28] sm:$0xf]
    %v34 = vld [vmem:[%s2 + $0x2c] sm:$0xf]
    %v35 = vld [vmem:[%s2 + $0x30] sm:$0xf]
    %v36 = vld [vmem:[%s2 + $0x34] sm:$0xf]
    %v37 = vld [vmem:[%s2 + $0x38] sm:$0xf]
    %v38 = vld [vmem:[%s2 + $0x3c] sm:$0xf]
    %v55 = vunpack.c.l.b16 %v23
    %v56 = vunpack.c.l.b16 %v24
    %v57 = vunpack.c.l.b16 %v25
    %v58 = vunpack.c.l.b16 %v26
    %v59 = vunpack.c.l.b16 %v27
    %v60 = vunpack.c.l.b16 %v28
    %v61 = vunpack.c.l.b16 %v29
    %v62 = vunpack.c.l.b16 %v30
    %v63 = vunpack.c.l.b16 %v31
    %v64 = vunpack.c.l.b16 %v32
    %v65 = vunpack.c.l.b16 %v33
    %v66 = vunpack.c.l.b16 %v34
    %v67 = vunpack.c.l.b16 %v35
    %v68 = vunpack.c.l.b16 %v36
    %v69 = vunpack.c.l.b16 %v37
    %v70 = vunpack.c.l.b16 %v38
    %v71 = vpack.c.b16 %v56, %v55
    %v72 = vpack.c.b16 %v58, %v57
    %v73 = vpack.c.b16 %v60, %v59
    %v74 = vpack.c.b16 %v62, %v61
    %v75 = vpack.c.b16 %v64, %v63
    %v76 = vpack.c.b16 %v66, %v65
    %v77 = vpack.c.b16 %v68, %v67
    %v78 = vpack.c.b16 %v70, %v69
    %87 = vmatprep.subr.bf16.mxu0 0
    %88 = vmatpush1.bf16.msra.mxu0 %v71
    %89 = vmatprep.subr.bf16.mxu0 0
    %90 = vmatpush1.bf16.msra.mxu0 %v72
    %91 = vmatprep.subr.bf16.mxu0 0
    %92 = vmatpush1.bf16.msra.mxu0 %v73
    %93 = vmatprep.subr.bf16.mxu0 0
    %94 = vmatpush1.bf16.msra.mxu0 %v74
    %95 = vmatprep.subr.bf16.mxu0 0
    %96 = vmatpush1.bf16.msra.mxu0 %v75
    %97 = vmatprep.subr.bf16.mxu0 0
    %98 = vmatpush1.bf16.msra.mxu0 %v76
    %99 = vmatprep.subr.bf16.mxu0 0
    %100 = vmatpush1.bf16.msra.mxu0 %v77
    %101 = vmatprep.subr.bf16.mxu0 0
    %102 = vmatpush1.bf16.msra.mxu0 %v78
    %103 = vmatprep.subr.bf16.mxu0 0
    %104 = vmatpush1.bf16.msra.mxu0 0
    %105 = vmatprep.subr.bf16.mxu0 0
    %106 = vmatpush1.bf16.msra.mxu0 0
    %107 = vmatprep.subr.bf16.mxu0 0
    %108 = vmatpush1.bf16.msra.mxu0 0
    %109 = vmatprep.subr.bf16.mxu0 0
    %110 = vmatpush1.bf16.msra.mxu0 0
    %111 = vmatprep.subr.bf16.mxu0 0
    %112 = vmatpush1.bf16.msra.mxu0 0
    %113 = vmatprep.subr.bf16.mxu0 0
    %114 = vmatpush1.bf16.msra.mxu0 0
    %115 = vmatprep.subr.bf16.mxu0 0
    %116 = vmatpush1.bf16.msra.mxu0 0
    %117 = vmatprep.subr.bf16.mxu0 0
    %118 = vmatpush1.bf16.msra.mxu0 0
    %119 = vmatprep.mubr.bf16.mxu0 0
    %120 = vmatmul.mubr.bf16.gmra.mrb[0].mxu0 %v22
    %v121 = vpop.f32.mrb[0].mxu0
    %v122 = vadd.f32 0.0, %v121
    %v123 = vpop.f32.mrb[0].mxu0
    %v124 = vpop.f32.mrb[0].mxu0
    %v125 = vpop.f32.mrb[0].mxu0
    %126 = vdwg.mxu0
    %v127 = vmul.f32 %v122, 0.17677669
    %v128 = vpack.c.bf16 %v127, %v127
    %129 = vst [vmem:[#allocation2] sm:$0xf] %v128
    %vm130 = vcmask 7168
    %131 = vst.msk [vmem:[#allocation3] sm:$0xff] %vm130, -inf
    %132 = vst.msk [vmem:[#allocation4] sm:$0xff] %vm130, 0.0
    %133 = vst [vmem:[#allocation5] sm:$0xff] 0.0
  $region21: #{self_attention_layer2.1} parent=0 // pred_fallthru
    _
  %v134 = vld [vmem:[%s1] sm:$0xf]
  %v135 = vld [vmem:[%s3] sm:$0xf]
  %v136 = vld [vmem:[%s3 + $0x4] sm:$0xf]
  %v137 = vld [vmem:[%s3 + $0x8] sm:$0xf]
  %v138 = vld [vmem:[%s3 + $0xc] sm:$0xf]
  %v139 = vld [vmem:[%s3 + $0x10] sm:$0xf]
  %v140 = vld [vmem:[%s3 + $0x14] sm:$0xf]
  %v141 = vld [vmem:[%s3 + $0x18] sm:$0xf]
  %v142 = vld [vmem:[%s3 + $0x1c] sm:$0xf]
  %v143 = vld [vmem:[%s3 + $0x20] sm:$0xf]
  %v144 = vld [vmem:[%s3 + $0x24] sm:$0xf]
  %v145 = vld [vmem:[%s3 + $0x28] sm:$0xf]
  %v146 = vld [vmem:[%s3 + $0x2c] sm:$0xf]
  %v147 = vld [vmem:[%s3 + $0x30] sm:$0xf]
  %v148 = vld [vmem:[%s3 + $0x34] sm:$0xf]
  %v149 = vld [vmem:[%s3 + $0x38] sm:$0xf]
  %v150 = vld [vmem:[%s3 + $0x3c] sm:$0xf]
  %v167 = vunpack.c.l.b16 %v135
  %v168 = vunpack.c.l.b16 %v136
  %v169 = vunpack.c.l.b16 %v137
  %v170 = vunpack.c.l.b16 %v138
  %v171 = vunpack.c.l.b16 %v139
  %v172 = vunpack.c.l.b16 %v140
  %v173 = vunpack.c.l.b16 %v141
  %v174 = vunpack.c.l.b16 %v142
  %v175 = vunpack.c.l.b16 %v143
  %v176 = vunpack.c.l.b16 %v144
  %v177 = vunpack.c.l.b16 %v145
  %v178 = vunpack.c.l.b16 %v146
  %v179 = vunpack.c.l.b16 %v147
  %v180 = vunpack.c.l.b16 %v148
  %v181 = vunpack.c.l.b16 %v149
  %v182 = vunpack.c.l.b16 %v150
  %v183 = vpack.c.b16 %v168, %v167
  %v184 = vpack.c.b16 %v170, %v169
  %v185 = vpack.c.b16 %v172, %v171
  %v186 = vpack.c.b16 %v174, %v173
  %v187 = vpack.c.b16 %v176, %v175
  %v188 = vpack.c.b16 %v178, %v177
  %v189 = vpack.c.b16 %v180, %v179
  %v190 = vpack.c.b16 %v182, %v181
  %199 = vmatprep.subr.bf16.mxu0 0
  %200 = vmatpush1.bf16.msra.mxu0 %v183
  %201 = vmatprep.subr.bf16.mxu0 0
  %202 = vmatpush1.bf16.msra.mxu0 %v184
  %203 = vmatprep.subr.bf16.mxu0 0
  %204 = vmatpush1.bf16.msra.mxu0 %v185
  %205 = vmatprep.subr.bf16.mxu0 0
  %206 = vmatpush1.bf16.msra.mxu0 %v186
  %207 = vmatprep.subr.bf16.mxu0 0
  %208 = vmatpush1.bf16.msra.mxu0 %v187
  %209 = vmatprep.subr.bf16.mxu0 0
  %210 = vmatpush1.bf16.msra.mxu0 %v188
  %211 = vmatprep.subr.bf16.mxu0 0
  %212 = vmatpush1.bf16.msra.mxu0 %v189
  %213 = vmatprep.subr.bf16.mxu0 0
  %214 = vmatpush1.bf16.msra.mxu0 %v190
  %215 = vmatprep.subr.bf16.mxu0 0
  %216 = vmatpush1.bf16.msra.mxu0 0
  %217 = vmatprep.subr.bf16.mxu0 0
  %218 = vmatpush1.bf16.msra.mxu0 0
  %219 = vmatprep.subr.bf16.mxu0 0
  %220 = vmatpush1.bf16.msra.mxu0 0
  %221 = vmatprep.subr.bf16.mxu0 0
  %222 = vmatpush1.bf16.msra.mxu0 0
  %223 = vmatprep.subr.bf16.mxu0 0
  %224 = vmatpush1.bf16.msra.mxu0 0
  %225 = vmatprep.subr.bf16.mxu0 0
  %226 = vmatpush1.bf16.msra.mxu0 0
  %227 = vmatprep.subr.bf16.mxu0 0
  %228 = vmatpush1.bf16.msra.mxu0 0
  %229 = vmatprep.subr.bf16.mxu0 0
  %230 = vmatpush1.bf16.msra.mxu0 0
  %231 = vmatprep.mubr.bf16.mxu0 0
  %232 = vmatmul.mubr.bf16.gmra.mrb[0].mxu0 %v134
  %v233 = vpop.f32.mrb[0].mxu0
  %v234 = vadd.f32 0.0, %v233
  %v235 = vpop.f32.mrb[0].mxu0
  %v236 = vpop.f32.mrb[0].mxu0
  %v237 = vpop.f32.mrb[0].mxu0
  %238 = vdwg.mxu0
  %v239 = vpack.c.bf16 %v234, %v234
  %v240 = vld [vmem:[#allocation2] sm:$0xf]
  %241 = vmatprep.subr.bf16.mxu0 0
  %242 = vmatpush1.bf16.xpose.msra.mxu0 %v239
  %243 = vmatprep.subr.bf16.mxu0 0
  %244 = vmatpush1.bf16.xpose.msra.mxu0 0
  %245 = vmatprep.subr.bf16.mxu0 0
  %246 = vmatpush1.bf16.xpose.msra.mxu0 0
  %247 = vmatprep.subr.bf16.mxu0 0
  %248 = vmatpush1.bf16.xpose.msra.mxu0 0
  %249 = vmatprep.subr.bf16.mxu0 0
  %250 = vmatpush1.bf16.xpose.msra.mxu0 0
  %251 = vmatprep.subr.bf16.mxu0 0
  %252 = vmatpush1.bf16.xpose.msra.mxu0 0
  %253 = vmatprep.subr.bf16.mxu0 0
  %254 = vmatpush1.bf16.xpose.msra.mxu0 0
  %255 = vmatprep.subr.bf16.mxu0 0
  %256 = vmatpush1.bf16.xpose.msra.mxu0 0
  %257 = vmatprep.subr.bf16.mxu0 0
  %258 = vmatpush1.bf16.xpose.msra.mxu0 0
  %259 = vmatprep.subr.bf16.mxu0 0
  %260 = vmatpush1.bf16.xpose.msra.mxu0 0
  %261 = vmatprep.subr.bf16.mxu0 0
  %262 = vmatpush1.bf16.xpose.msra.mxu0 0
  %263 = vmatprep.subr.bf16.mxu0 0
  %264 = vmatpush1.bf16.xpose.msra.mxu0 0
  %265 = vmatprep.subr.bf16.mxu0 0
  %266 = vmatpush1.bf16.xpose.msra.mxu0 0
  %267 = vmatprep.subr.bf16.mxu0 0
  %268 = vmatpush1.bf16.xpose.msra.mxu0 0
  %269 = vmatprep.subr.bf16.mxu0 0
  %270 = vmatpush1.bf16.xpose.msra.mxu0 0
  %271 = vmatprep.subr.bf16.mxu0 0
  %272 = vmatpush1.bf16.xpose.msra.mxu0 0
  %273 = vmatprep.mubr.bf16.mxu0 0
  %274 = vmatmul.mubr.bf16.gmra.mrb[0].mxu0 %v240
  %v275 = vpop.f32.mrb[0].mxu0
  %v276 = vadd.f32 0.0, %v275
  %v277 = vpop.f32.mrb[0].mxu0
  %v278 = vpop.f32.mrb[0].mxu0
  %v279 = vpop.f32.mrb[0].mxu0
  %280 = vdwg.mxu0
  %s281 = smul.u32 0, 8
  %v282 = vlaneseq
  %v283 = vand.u32 %v282, 127
  %v284 = vstv %s281
  %v285 = vadd.s32 %v284, %v283
  %vm286 = vcmp.lt.s32.totalorder %v285, 8
  %v287 = vsel %vm286, %v276, -1e+30
  %v288 = vld [vmem:[#allocation3] sm:$0xff]
  %vm289 = vcmask 64512
  %v290 = vsel %vm289, %v287, -inf
  %291 = vmax.xlane.f32.xlu0 %v290
  %v292 = vpop.xlane.xlu0 %291
  %v293 = vmax.f32 %v288, %v292
  %v294 = vsub.f32 %v288, %v293
  %v295 = vmul.f32 %v294, 1.442695
  %v296 = vpow.pop %v295
  %298 = vset.pattern.permute.xlu0 0
  %299 = vperm.xlu0 %298, %v293
  %v300 = vpop.permute.xlu0 %299
  %v302 = vsub.f32 %v287, %v300
  %v303 = vmul.f32 %v302, 1.442695
  %v304 = vpow.pop %v303
  %v305 = vld [vmem:[#allocation4] sm:$0xff]
  %v306 = vmul.f32 %v296, %v305
  %v307 = vsel %vm289, %v304, 0.0
  %308 = vadd.xlane.f32.xlu0 %v307
  %v309 = vpop.xlane.xlu0 %308
  %v310 = vadd.f32 %v306, %v309
  %vm311 = vcmask 7168
  %312 = vst.msk [vmem:[#allocation4] sm:$0xff] %vm311, %v310
  %v313 = vld [vmem:[#allocation5] sm:$0xff]
  %315 = vset.pattern.permute.xlu0 0
  %316 = vperm.xlu0 %315, %v296
  %v317 = vpop.permute.xlu0 %316
  %v319 = vmul.f32 %v317, %v313
  %v320 = vpack.c.bf16 %v304, %v304
  %v321 = vld [vmem:[%s1] sm:$0xf]
  %v323 = vsel %vm289, %v320, 0
  %vm325 = vcmask 1043456
  %v327 = vsel %vm325, %v321, 0
  %329 = vmatprep.subr.bf16.mxu0 0
  %330 = vmatpush1.bf16.msra.mxu0 %v327
  %331 = vmatprep.subr.bf16.mxu0 0
  %332 = vmatpush1.bf16.msra.mxu0 0
  %333 = vmatprep.subr.bf16.mxu0 0
  %334 = vmatpush1.bf16.msra.mxu0 0
  %335 = vmatprep.subr.bf16.mxu0 0
  %336 = vmatpush1.bf16.msra.mxu0 0
  %337 = vmatprep.subr.bf16.mxu0 0
  %338 = vmatpush1.bf16.msra.mxu0 0
  %339 = vmatprep.subr.bf16.mxu0 0
  %340 = vmatpush1.bf16.msra.mxu0 0
  %341 = vmatprep.subr.bf16.mxu0 0
  %342 = vmatpush1.bf16.msra.mxu0 0
  %343 = vmatprep.subr.bf16.mxu0 0
  %344 = vmatpush1.bf16.msra.mxu0 0
  %345 = vmatprep.subr.bf16.mxu0 0
  %346 = vmatpush1.bf16.msra.mxu0 0
  %347 = vmatprep.subr.bf16.mxu0 0
  %348 = vmatpush1.bf16.msra.mxu0 0
  %349 = vmatprep.subr.bf16.mxu0 0
  %350 = vmatpush1.bf16.msra.mxu0 0
  %351 = vmatprep.subr.bf16.mxu0 0
  %352 = vmatpush1.bf16.msra.mxu0 0
  %353 = vmatprep.subr.bf16.mxu0 0
  %354 = vmatpush1.bf16.msra.mxu0 0
  %355 = vmatprep.subr.bf16.mxu0 0
  %356 = vmatpush1.bf16.msra.mxu0 0
  %357 = vmatprep.subr.bf16.mxu0 0
  %358 = vmatpush1.bf16.msra.mxu0 0
  %359 = vmatprep.subr.bf16.mxu0 0
  %360 = vmatpush1.bf16.msra.mxu0 0
  %361 = vmatprep.mubr.bf16.mxu0 0
  %362 = vmatmul.mubr.bf16.gmra.mrb[0].mxu0 %v323
  %v363 = vpop.f32.mrb[0].mxu0
  %v364 = vadd.f32 0.0, %v363
  %v365 = vpop.f32.mrb[0].mxu0
  %v366 = vpop.f32.mrb[0].mxu0
  %v367 = vpop.f32.mrb[0].mxu0
  %368 = vdwg.mxu0
  %v369 = vadd.f32 %v319, %v364
  %370 = vst [vmem:[#allocation5] sm:$0xff] %v369
  %371 = vst.msk [vmem:[#allocation3] sm:$0xff] %vm311, %v293
  // Predicated region
  $region22: #{self_attention_layer2.1} parent=0 // pred_check
    %p372 = pneg %p18
  $region23: #{self_attention_layer2.1} parent=0 // pred_check_branch
    %374 = sbr.rel (%p372) target = $region25
  $region24: #{self_attention_layer2.1} parent=0 // pred_region
    %s375 = smul.u32 0, 8
    %v376 = vlaneseq
    %v377 = vshrl.u32 %v376, 7
    %v378 = vstv %s375
    %v379 = vadd.s32 %v378, %v377
    %vm380 = vcmp.lt.s32.totalorder %v379, 8
    %v381 = vld [vmem:[#allocation4] sm:$0xff]
    %v382 = vrcp.pop %v381
    %v383 = vmul.f32 %v382, 0.125
    %v384 = vsel %vm380, %v383, 0.0
    %v385 = vld [vmem:[#allocation5] sm:$0xff]
    %387 = vset.pattern.permute.xlu0 0
    %388 = vperm.xlu0 %387, %v384
    %v389 = vpop.permute.xlu0 %388
    %v391 = vmul.f32 %v385, %v389
    %v392 = vrot.slane %v391, 4
    %v393 = vadd.f32 %v391, %v392
    %v394 = vrot.slane %v393, 2
    %v395 = vadd.f32 %v393, %v394
    %v396 = vrot.slane %v395, 1
    %v397 = vadd.f32 %v395, %v396
    %398 = vst [vmem:[%s4] sm:$0xff] %v397
  $region25: #{self_attention_layer2.1} parent=0 // pred_fallthru
    _
  // Predicated region
  $region26: #{self_attention_layer2.1} parent=0 // pred_check
    _
  $region27: #{self_attention_layer2.1} parent=0 // pred_check_branch
    %400 = sbr.rel (0) target = $region29
  $region28: #{self_attention_layer2.1} parent=0 // pred_region
    _
  $region29: #{self_attention_layer2.1} parent=0 // pred_fallthru
    _
  // Predicated region
  $region30: #{self_attention_layer2.1} parent=0 // pred_check
    _
  $region31: #{self_attention_layer2.1} parent=0 // pred_check_branch
    %402 = sbr.rel (0) target = $region33
  $region32: #{self_attention_layer2.1} parent=0 // pred_region
    _
  $region33: #{self_attention_layer2.1} parent=0 // pred_fallthru
    _

</llo_original>
